<compile_context>
chip_gen: v6e
topology: v6e:2x2x1
jax: 0.10.0
libtpu: 0.0.40
codegen_flags: <defaults>
</compile_context>

<pallas_src>
import jax
import jax.numpy as jnp
from jax import lax
from jax.experimental import pallas as pl
from jax.experimental.pallas import tpu as pltpu


def _fused_kernel(x_ref, quad_ref, wb_ref, o_ref):
    # x_ref    : (NB, H, 2)   t1 with the single input channel squeezed
    #                         (H == K on sublanes, W == 2 on lanes)
    # quad_ref : (NB, 4, L)   per-output-lane 2x2 pool window values,
    #                         L = H1*W = H ; row 0 is x[n, 2i, 0] (conv sample)
    # wb_ref   : (K, 2)       column 0 = 1x1-conv weight, column 1 = bias
    # o_ref    : (NB, K, L)   flat NCHW output block (lane-dense, L = H)
    xq = quad_ref[...]                                    # (NB, 4, L)
    xe = xq[:, 0:1, :]                                    # (NB, 1, L) conv input sample
    mp = jnp.max(xq, axis=1, keepdims=True)               # (NB, 1, L) 2x2 maxpool (in-kernel)

    w_col = wb_ref[:, 0:1][None]                          # (1, K, 1)
    b_col = wb_ref[:, 1:2][None]                          # (1, K, 1)

    x0 = x_ref[:, :, 0:1]                                 # (NB, K, 1) = t1[n, 0, k, 0]
    x1 = x_ref[:, :, 1:2]                                 # (NB, K, 1) = t1[n, 0, k, 1]
    L = o_ref.shape[-1]
    parity = lax.broadcasted_iota(jnp.int32, (1, 1, L), 2) % 2
    # transpose(t1, 2, 1) broadcast against v1: element (n,k,i,w) is t1[n,0,k,w]
    x_t = jnp.where(parity == 0, x0, x1)                  # (NB, K, L)

    # 1x1 conv, stride 2, C_in == 1  ->  rank-1 product on the VPU (no MXU)
    v1 = w_col * xe + b_col                               # (NB, K, L)
    v3 = jnp.maximum(v1 - x_t, 0.0)                       # relu(v1 - t1.transpose(2,1))
    o_ref[...] = jnp.maximum(v3 - mp, 0.0)                # relu(v3 - maxpool(t1))


def model_forward(t1, weight, bias, *, block_n=4):
    """t1: (N, 1, H, 2) f32 NCHW; weight: (K, 1, 1, 1); bias: (K,).  K == H, H even."""
    N, C_in, H, W = t1.shape
    K = weight.shape[0]
    assert C_in == 1 and K == H and H % 2 == 0 and W == 2
    H1 = H // 2
    L = H1 * W                                            # == H : flat (h_out, w_out)

    # largest batch block that divides N (keeps specs simple; blocks pipeline)
    block_n = next(b for b in (block_n, 4, 2, 1) if b <= N and N % b == 0)

    x = t1.astype(jnp.float32).reshape(N, H, W)           # free view (channel squeezed)

    # Pre-gathered 2x2 pooling window, one column of 4 values per output lane
    # (index plumbing only -- the max / conv arithmetic stays in the kernel).
    xw = x.reshape(N, H1, 2, W)                           # (N, H1, 2, 2)
    quad = jnp.stack(
        [xw[:, :, 0, 0], xw[:, :, 0, 1], xw[:, :, 1, 0], xw[:, :, 1, 1]],
        axis=1)                                           # (N, 4, H1)
    x_quad = jnp.repeat(quad, 2, axis=-1)                 # (N, 4, L)  (repeat per w)

    wb = jnp.stack([weight.reshape(K).astype(jnp.float32),
                    bias.reshape(K).astype(jnp.float32)], axis=-1)   # (K, 2)

    out_flat = pl.pallas_call(
        _fused_kernel,
        out_shape=jax.ShapeDtypeStruct((N, K, L), jnp.float32),
        grid=(N // block_n,),
        in_specs=[
            pl.BlockSpec((block_n, H, W), lambda i: (i, 0, 0)),
            pl.BlockSpec((block_n, 4, L), lambda i: (i, 0, 0)),
            pl.BlockSpec((K, 2), lambda i: (0, 0)),
        ],
        out_specs=pl.BlockSpec((block_n, K, L), lambda i: (i, 0, 0)),
        compiler_params=pltpu.CompilerParams(
            dimension_semantics=("parallel",)),
    )(x, x_quad, wb)

    # free reshape: (N, K, H1*W) is already NCHW-contiguous
    return out_flat.reshape(N, K, H1, W)


def model_forward_ref(t1, weight, bias):
    """Pure-JAX (elementwise, exact-f32) reference mirroring the PyTorch forward."""
    N, C, H, W = t1.shape
    K = weight.shape[0]
    x = t1[:, 0]                                          # (N, H, W)
    xs = x[:, ::2, ::2]                                   # conv samples (N, H1, 1)
    v1 = weight.reshape(1, K, 1, 1) * xs[:, None] + bias.reshape(1, K, 1, 1)
    v2 = v1 - jnp.transpose(t1, (0, 2, 1, 3))             # broadcast: K == H
    v3 = jnp.maximum(v2, 0.0)
    mp = jnp.max(x.reshape(N, H // 2, 2, W // 2, 2), axis=(2, 4))[:, None]
    v4 = v3 - mp
    return jnp.maximum(v4, 0.0)


if __name__ == "__main__":
    # Smallest consistent configuration keeping the module's C_out = 128:
    # C_in = 1, H = C_out = 128, W = 2.
    N, C_in, H, W = 8, 1, 128, 2
    K = 128

    key = jax.random.PRNGKey(0)
    k1, k2, k3 = jax.random.split(key, 3)
    t1 = jax.random.normal(k1, (N, C_in, H, W), dtype=jnp.float32)
    weight = jax.random.normal(k2, (K, C_in, 1, 1), dtype=jnp.float32) * 0.5
    bias = jax.random.normal(k3, (K,), dtype=jnp.float32) * 0.1

    out = jax.jit(model_forward)(t1, weight, bias)
    out = jax.block_until_ready(out)

    ref = model_forward_ref(t1, weight, bias)
    assert out.shape == ref.shape == (N, K, H // 2, W), (out.shape, ref.shape)
    assert jnp.allclose(out, ref, atol=1e-5, rtol=1e-5)
    print("KERNEL_OK")
</pallas_src>

<mosaic_0001>
module attributes {stable_mosaic.version = 11 : i64} {
  func.func @_fused_kernel(%arg0: i32, %arg1: memref<4x128x2xf32, #tpu.memory_space<vmem>>, %arg2: memref<4x4x128xf32, #tpu.memory_space<vmem>>, %arg3: memref<128x2xf32, #tpu.memory_space<vmem>>, %arg4: memref<4x128x128xf32, #tpu.memory_space<vmem>>) attributes {dimension_semantics = [#tpu.dimension_semantics<parallel>], iteration_bounds = array<i64: 2>, scalar_prefetch = 0 : i64, scratch_operands = 0 : i64, tpu.core_type = #tpu.core_type<tc>, window_params = [{transform_indices = @transform_0, window_bounds = array<i64: 4, 128, 2>}, {transform_indices = @transform_1, window_bounds = array<i64: 4, 4, 128>}, {pipeline_mode = #tpu.pipeline_mode<synchronous>, transform_indices = @transform_2, window_bounds = array<i64: 128, 2>}, {transform_indices = @transform_3, window_bounds = array<i64: 4, 128, 128>}]} {
    %c0 = arith.constant 0 : index
    %c0_0 = arith.constant 0 : index
    %c0_1 = arith.constant 0 : index
    %0 = vector.load %arg2[%c0, %c0_0, %c0_1] : memref<4x4x128xf32, #tpu.memory_space<vmem>>, vector<4x4x128xf32>
    %1 = vector.extract_strided_slice %0 {offsets = [0, 0, 0], sizes = [4, 1, 128], strides = [1, 1, 1]} : vector<4x4x128xf32> to vector<4x1x128xf32>
    %cst = arith.constant dense<0xFF800000> : vector<4x128xf32>
    %2 = vector.multi_reduction <maximumf>, %0, %cst [1] : vector<4x4x128xf32> to vector<4x128xf32>
    %3 = vector.shape_cast %2 : vector<4x128xf32> to vector<4x1x128xf32>
    %c0_2 = arith.constant 0 : index
    %c0_3 = arith.constant 0 : index
    %4 = vector.load %arg3[%c0_2, %c0_3] : memref<128x2xf32, #tpu.memory_space<vmem>>, vector<128x1xf32>
    %5 = vector.shape_cast %4 : vector<128x1xf32> to vector<1x128x1xf32>
    %c0_4 = arith.constant 0 : index
    %c1 = arith.constant 1 : index
    %6 = vector.load %arg3[%c0_4, %c1] : memref<128x2xf32, #tpu.memory_space<vmem>>, vector<128x1xf32>
    %7 = vector.shape_cast %6 : vector<128x1xf32> to vector<1x128x1xf32>
    %c0_5 = arith.constant 0 : index
    %c0_6 = arith.constant 0 : index
    %c0_7 = arith.constant 0 : index
    %8 = vector.load %arg1[%c0_5, %c0_6, %c0_7] : memref<4x128x2xf32, #tpu.memory_space<vmem>>, vector<4x128x1xf32>
    %c0_8 = arith.constant 0 : index
    %c0_9 = arith.constant 0 : index
    %c1_10 = arith.constant 1 : index
    %9 = vector.load %arg1[%c0_8, %c0_9, %c1_10] : memref<4x128x2xf32, #tpu.memory_space<vmem>>, vector<4x128x1xf32>
    %10 = tpu.iota {dimensions = array<i32: 2>} : vector<1x1x128xi32>
    %c2_i32 = arith.constant 2 : i32
    %c0_i32 = arith.constant 0 : i32
    %11 = arith.cmpi eq, %c2_i32, %c0_i32 : i32
    %c1_i32 = arith.constant 1 : i32
    %12 = arith.select %11, %c1_i32, %c2_i32 : i32
    %13 = vector.broadcast %12 : i32 to vector<1x1x128xi32>
    %14 = arith.remsi %10, %13 : vector<1x1x128xi32>
    %c0_i32_11 = arith.constant 0 : i32
    %15 = vector.broadcast %c0_i32_11 : i32 to vector<1x1x128xi32>
    %16 = arith.cmpi ne, %14, %15 : vector<1x1x128xi32>
    %c0_i32_12 = arith.constant 0 : i32
    %17 = vector.broadcast %c0_i32_12 : i32 to vector<1x1x128xi32>
    %18 = arith.cmpi slt, %14, %17 : vector<1x1x128xi32>
    %c0_i32_13 = arith.constant 0 : i32
    %19 = arith.cmpi slt, %12, %c0_i32_13 : i32
    %20 = vector.broadcast %19 : i1 to vector<1x1x128xi1>
    %21 = vector.broadcast %20 : vector<1x1x128xi1> to vector<1x1x128xi1>
    %22 = arith.xori %18, %21 : vector<1x1x128xi1>
    %23 = arith.andi %22, %16 : vector<1x1x128xi1>
    %24 = vector.broadcast %12 : i32 to vector<1x1x128xi32>
    %25 = arith.addi %14, %24 : vector<1x1x128xi32>
    %26 = arith.select %23, %25, %14 : vector<1x1x128xi1>, vector<1x1x128xi32>
    %c0_i32_14 = arith.constant 0 : i32
    %27 = vector.broadcast %c0_i32_14 : i32 to vector<1x1x128xi32>
    %28 = arith.cmpi eq, %26, %27 : vector<1x1x128xi32>
    %29 = vector.shape_cast %28 : vector<1x1x128xi1> to vector<1x1x128xi1>
    %30 = vector.broadcast %29 : vector<1x1x128xi1> to vector<4x128x128xi1>
    %31 = vector.shape_cast %8 : vector<4x128x1xf32> to vector<4x128x1xf32>
    %32 = vector.broadcast %31 : vector<4x128x1xf32> to vector<4x128x128xf32>
    %33 = vector.shape_cast %9 : vector<4x128x1xf32> to vector<4x128x1xf32>
    %34 = vector.broadcast %33 : vector<4x128x1xf32> to vector<4x128x128xf32>
    %35 = arith.select %30, %32, %34 : vector<4x128x128xi1>, vector<4x128x128xf32>
    %36 = vector.broadcast %5 : vector<1x128x1xf32> to vector<4x128x128xf32>
    %37 = vector.broadcast %1 : vector<4x1x128xf32> to vector<4x128x128xf32>
    %38 = arith.mulf %36, %37 : vector<4x128x128xf32>
    %39 = vector.broadcast %7 : vector<1x128x1xf32> to vector<4x128x128xf32>
    %40 = arith.addf %38, %39 : vector<4x128x128xf32>
    %41 = arith.subf %40, %35 : vector<4x128x128xf32>
    %cst_15 = arith.constant 0.000000e+00 : f32
    %42 = vector.broadcast %cst_15 : f32 to vector<4x128x128xf32>
    %43 = arith.maximumf %41, %42 : vector<4x128x128xf32>
    %44 = vector.broadcast %3 : vector<4x1x128xf32> to vector<4x128x128xf32>
    %45 = arith.subf %43, %44 : vector<4x128x128xf32>
    %cst_16 = arith.constant 0.000000e+00 : f32
    %46 = vector.broadcast %cst_16 : f32 to vector<4x128x128xf32>
    %47 = arith.maximumf %45, %46 : vector<4x128x128xf32>
    %c0_17 = arith.constant 0 : index
    %c0_18 = arith.constant 0 : index
    %c0_19 = arith.constant 0 : index
    %48 = vector.load %arg4[%c0_17, %c0_18, %c0_19] : memref<4x128x128xf32, #tpu.memory_space<vmem>>, vector<4x128x128xf32>
    tpu.vector_store %arg4[%c0_17, %c0_18, %c0_19], %47 {strides = array<i32>} : memref<4x128x128xf32, #tpu.memory_space<vmem>>, vector<4x128x128xf32>,
    return
  }
  func.func @transform_0(%arg0: i32) -> (i32, i32, i32) {
    %c0_i32 = arith.constant 0 : i32
    %c0_i32_0 = arith.constant 0 : i32
    %c0_i32_1 = arith.constant 0 : i32
    return %arg0, %c0_i32, %c0_i32_0 : i32, i32, i32
  }
  func.func @transform_1(%arg0: i32) -> (i32, i32, i32) {
    %c0_i32 = arith.constant 0 : i32
    %c0_i32_0 = arith.constant 0 : i32
    %c0_i32_1 = arith.constant 0 : i32
    return %arg0, %c0_i32, %c0_i32_0 : i32, i32, i32
  }
  func.func @transform_2(%arg0: i32) -> (i32, i32) {
    %c0_i32 = arith.constant 0 : i32
    %c0_i32_0 = arith.constant 0 : i32
    %c0_i32_1 = arith.constant 0 : i32
    return %c0_i32, %c0_i32_0 : i32, i32
  }
  func.func @transform_3(%arg0: i32) -> (i32, i32, i32) {
    %c0_i32 = arith.constant 0 : i32
    %c0_i32_0 = arith.constant 0 : i32
    %c0_i32_1 = arith.constant 0 : i32
    return %arg0, %c0_i32, %c0_i32_0 : i32, i32, i32
  }
}

</mosaic_0001>

<llo_original>
// kernel: model_forward.1
$region0: #{model_forward.1}
  #allocation0 [shape = 'u32[]', space=smem, size = 0x4, offset = 0x4, fixed_abs, tag = 'smem constant byte address 0x4 - core index']
  #allocation1 [shape = 'u32[144,128]{1,0:T(1,128)}', space=vmem, size = 0x12000, scoped, tag = 'internal scratch']
  %s0 = inlined_call_operand.vmem [shape: f32[8,128,2], index: 0, kind: input, shape index: {}]
  %s1 = inlined_call_operand.vmem [shape: f32[8,4,128], index: 1, kind: input, shape index: {}]
  %s2 = inlined_call_operand.vmem [shape: f32[128,2], index: 2, kind: input, shape index: {}]
  %s3 = inlined_call_operand.vmem [shape: f32[8,128,128], index: 3, kind: output, shape index: {}]
  %s4 = sld [smem:[#allocation0]]
  $region45: #{model_forward.1} parent=0
    _
  %s6 = ssub.s32 1, %s4
  %s7 = scalar_select 0, %s6, %s4
  loop: start=0, step=1, limit=4
  $region2: #{model_forward.1} parent=0 // loop_pre_header
    _
  $region3: #{model_forward.1} parent=0 // loop_header
    %s9 = sphi 0, %s13
    %p10 = scmp.ge.s32.totalorder %s9, 4
    %s19 = sphi 0, %s21
    %s22 = sphi 0, %s19
    %s23 = sphi 0, %s22
    %s39 = sphi 0, %s23
    %s45 = sphi 0, %s47
    %s48 = sphi 0, %s45
    %s49 = sphi 0, %s48
    %s65 = sphi 0, %s49
    %s69 = sphi 0, %s69
    %s71 = sphi 0, %s69
    %s72 = sphi 0, %s71
    %s86 = sphi 0, %s72
    %s92 = sphi 0, %s94
    %s95 = sphi 0, %s92
    %s96 = sphi 0, %s95
    %s112 = sphi 0, %s96
  $region4: #{model_forward.1} parent=0 // loop_header_branch
    %12 = sbr.rel (%p10) target = $region8
  $region5: #{model_forward.1} parent=0 // loop_body
    %s14 = ssub.s32 %s9, 1
    %s15 = ssub.s32 %s9, 2
    %s16 = sadd.s32 %s9, 1
    %s17 = ssub.s32 %s9, %s16
    %p18 = scmp.eq.s32.totalorder %s17, 0
    %s20 = sadd.s32 %s19, 1
    %s21 = scalar_select %p18, %s19, %s20
    %p24 = pneg %p18
    %p25 = scmp.eq.s32.totalorder %s9, 1
    %p26 = por %p24, %p25
    %p27 = scmp.ne.s32.totalorder %s19, %s22
    %p28 = scmp.eq.s32.totalorder %s9, 0
    %p29 = por %p27, %p28
    %p30 = scmp.ne.s32.totalorder %s19, %s22
    %p31 = scmp.eq.s32.totalorder %s14, 1
    %p32 = por %p30, %p31
    %p33 = scmp.ne.s32.totalorder %s22, %s23
    %p34 = scmp.eq.s32.totalorder %s14, 0
    %p35 = por %p33, %p34
    %p36 = scmp.ne.s32.totalorder %s22, %s23
    %p37 = scmp.eq.s32.totalorder %s15, 1
    %p38 = por %p36, %p37
    %p40 = scmp.ne.s32.totalorder %s23, %s39
    %p41 = scmp.eq.s32.totalorder %s15, 0
    %p42 = por %p40, %p41
    %s43 = ssub.s32 %s9, %s16
    %p44 = scmp.eq.s32.totalorder %s43, 0
    %s46 = sadd.s32 %s45, 1
    %s47 = scalar_select %p44, %s45, %s46
    %p50 = pneg %p44
    %p51 = scmp.eq.s32.totalorder %s9, 1
    %p52 = por %p50, %p51
    %p53 = scmp.ne.s32.totalorder %s45, %s48
    %p54 = scmp.eq.s32.totalorder %s9, 0
    %p55 = por %p53, %p54
    %p56 = scmp.ne.s32.totalorder %s45, %s48
    %p57 = scmp.eq.s32.totalorder %s14, 1
    %p58 = por %p56, %p57
    %p59 = scmp.ne.s32.totalorder %s48, %s49
    %p60 = scmp.eq.s32.totalorder %s14, 0
    %p61 = por %p59, %p60
    %p62 = scmp.ne.s32.totalorder %s48, %s49
    %p63 = scmp.eq.s32.totalorder %s15, 1
    %p64 = por %p62, %p63
    %p66 = scmp.ne.s32.totalorder %s49, %s65
    %p67 = scmp.eq.s32.totalorder %s15, 0
    %p68 = por %p66, %p67
    %s70 = sadd.s32 %s69, 1
    %p73 = scmp.eq.s32.totalorder %s9, 1
    %p74 = scmp.ne.s32.totalorder %s69, %s71
    %p75 = scmp.eq.s32.totalorder %s9, 0
    %p76 = por %p74, %p75
    %p77 = scmp.ne.s32.totalorder %s69, %s71
    %p78 = scmp.eq.s32.totalorder %s14, 1
    %p79 = por %p77, %p78
    %p80 = scmp.ne.s32.totalorder %s71, %s72
    %p81 = scmp.eq.s32.totalorder %s14, 0
    %p82 = por %p80, %p81
    %p83 = scmp.ne.s32.totalorder %s71, %s72
    %p84 = scmp.eq.s32.totalorder %s15, 1
    %p85 = por %p83, %p84
    %p87 = scmp.ne.s32.totalorder %s72, %s86
    %p88 = scmp.eq.s32.totalorder %s15, 0
    %p89 = por %p87, %p88
    %s90 = ssub.s32 %s9, %s16
    %p91 = scmp.eq.s32.totalorder %s90, 0
    %s93 = sadd.s32 %s92, 1
    %s94 = scalar_select %p91, %s92, %s93
    %p97 = pneg %p91
    %p98 = scmp.eq.s32.totalorder %s9, 1
    %p99 = por %p97, %p98
    %p100 = scmp.ne.s32.totalorder %s92, %s95
    %p101 = scmp.eq.s32.totalorder %s9, 0
    %p102 = por %p100, %p101
    %p103 = scmp.ne.s32.totalorder %s92, %s95
    %p104 = scmp.eq.s32.totalorder %s14, 1
    %p105 = por %p103, %p104
    %p106 = scmp.ne.s32.totalorder %s95, %s96
    %p107 = scmp.eq.s32.totalorder %s14, 0
    %p108 = por %p106, %p107
    %p109 = scmp.ne.s32.totalorder %s95, %s96
    %p110 = scmp.eq.s32.totalorder %s15, 1
    %p111 = por %p109, %p110
    %p113 = scmp.ne.s32.totalorder %s96, %s112
    %p114 = scmp.eq.s32.totalorder %s15, 0
    %p115 = por %p113, %p114
    %p116 = scmp.le.s32.totalorder 1, %s9
    %p117 = scmp.lt.s32.totalorder %s9, 3
    %p118 = pnand %p116, %p117
    %p119 = pneg %p118
    // Predicated region
    $region9: #{model_forward.1} parent=5 // pred_check
      _
    $region10: #{model_forward.1} parent=5 // pred_check_branch
      %121 = sbr.rel (%p118) target = $region12
    $region11: #{model_forward.1} parent=5 // pred_region
      %s122 = ssub.s32 %s9, 1
      // Predicated region
      $region13: #{model_forward.1} parent=11 // pred_check
        %p123 = pneg %p82
      $region14: #{model_forward.1} parent=11 // pred_check_branch
        %125 = sbr.rel (%p123) target = $region16
      $region15: #{model_forward.1} parent=11 // pred_region
        _
      $region16: #{model_forward.1} parent=11 // pred_fallthru
        _
    $region12: #{model_forward.1} parent=5 // pred_fallthru
      _
    %p126 = scmp.lt.s32.totalorder %s9, 2
    // Predicated region
    $region17: #{model_forward.1} parent=5 // pred_check
      %p127 = pneg %p126
    $region18: #{model_forward.1} parent=5 // pred_check_branch
      %129 = sbr.rel (%p127) target = $region20
    $region19: #{model_forward.1} parent=5 // pred_region
      // Predicated region
      $region21: #{model_forward.1} parent=19 // pred_check
        %p130 = pneg %p29
      $region22: #{model_forward.1} parent=19 // pred_check_branch
        %132 = sbr.rel (%p130) target = $region24
      $region23: #{model_forward.1} parent=19 // pred_region
        %s133 = smul.u32 4, %s9
        %p134 = scmp.lt.s32.totalorder %s133, 7
        %s135 = scalar_select %p134, %s133, 7
        %s136 = smul.addr %s135, 16
        %s137 = smul.addr %s136, 8
        %s138 = scalar_lea.vmem %s0, %s137
        %s139 = smul.u32 4, %s9
      $region24: #{model_forward.1} parent=19 // pred_fallthru
        _
      // Predicated region
      $region25: #{model_forward.1} parent=19 // pred_check
        %p140 = pneg %p55
      $region26: #{model_forward.1} parent=19 // pred_check_branch
        %142 = sbr.rel (%p140) target = $region28
      $region27: #{model_forward.1} parent=19 // pred_region
        %s143 = smul.u32 4, %s9
        %p144 = scmp.lt.s32.totalorder %s143, 7
        %s145 = scalar_select %p144, %s143, 7
        %s146 = smul.addr %s145, 4
        %s147 = scalar_lea.vmem %s1, %s146
        %s148 = smul.u32 4, %s9
      $region28: #{model_forward.1} parent=19 // pred_fallthru
        _
    $region20: #{model_forward.1} parent=5 // pred_fallthru
      _
    %p149 = scmp.le.s32.totalorder 1, %s9
    %p150 = scmp.lt.s32.totalorder %s9, 3
    %p151 = pnand %p149, %p150
    %p152 = pneg %p151
    // Predicated region
    $region29: #{model_forward.1} parent=5 // pred_check
      _
    $region30: #{model_forward.1} parent=5 // pred_check_branch
      %154 = sbr.rel (%p151) target = $region32
    $region31: #{model_forward.1} parent=5 // pred_region
      %s155 = ssub.s32 %s9, 1
      %s156 = smul.u32 4, %s14
      %p157 = scmp.lt.s32.totalorder %s156, 7
      %s158 = scalar_select %p157, %s156, 7
      %s159 = smul.addr %s158, 16
      %s160 = smul.addr %s159, 8
      %s161 = scalar_lea.vmem %s0, %s160
      %p162 = pneg %p35
      %p163 = pneg %p32
      %s164 = smul.u32 4, %s14
      %p165 = scmp.lt.s32.totalorder %s164, 7
      %s166 = scalar_select %p165, %s164, 7
      %s167 = smul.addr %s166, 4
      %s168 = scalar_lea.vmem %s1, %s167
      %p169 = pneg %p61
      %p170 = pneg %p58
      %p171 = pneg %p82
      %p172 = pneg %p79
      %p173 = pneg %p108
      %p174 = pneg %p105
      %s175 = smul.u32 4, %s14
      %p176 = scmp.lt.s32.totalorder %s175, 7
      %s177 = scalar_select %p176, %s175, 7
      %s178 = smul.addr %s177, 16
      %s179 = smul.addr %s178, 8
      %s180 = scalar_lea.vmem %s3, %s179
      %s181 = smul.u32 4, %s14
      %p182 = scmp.lt.s32.totalorder %s181, 7
      %s183 = scalar_select %p182, %s181, 7
      %s184 = smul.addr %s183, 16
      %s185 = smul.addr %s184, 8
      %s186 = scalar_lea.vmem %s0, %s185
      %s187 = smul.u32 4, %s14
      %s188 = smul.u32 4, %s14
      %p189 = scmp.lt.s32.totalorder %s188, 7
      %s190 = scalar_select %p189, %s188, 7
      %s191 = smul.addr %s190, 4
      %s192 = scalar_lea.vmem %s1, %s191
      %s193 = smul.u32 4, %s14
      %s194 = smul.u32 4, %s14
      %p195 = scmp.lt.s32.totalorder %s194, 7
      %s196 = scalar_select %p195, %s194, 7
      %s197 = smul.addr %s196, 16
      %s198 = smul.addr %s197, 8
      %s199 = scalar_lea.vmem %s3, %s198
      %s200 = smul.u32 4, %s14
      %v201 = vld [vmem:[%s192] sm:$0xf]
      %v202 = vld [vmem:[%s192 + $0x4] sm:$0xf]
      %v203 = vld [vmem:[%s192 + $0x8] sm:$0xf]
      %v204 = vld [vmem:[%s192 + $0xc] sm:$0xf]
      %vm205 = vcmask 1043456
      %v206 = vsel %vm205, %v201, -inf
      %v207 = vrot.slane %v206, 4
      %v208 = vmax.f32 %v206, %v207
      %v209 = vrot.slane %v208, 2
      %v210 = vmax.f32 %v208, %v209
      %v211 = vrot.slane %v210, 1
      %v212 = vmax.f32 %v210, %v211
      %v213 = vsel %vm205, %v202, -inf
      %v214 = vrot.slane %v213, 4
      %v215 = vmax.f32 %v213, %v214
      %v216 = vrot.slane %v215, 2
      %v217 = vmax.f32 %v215, %v216
      %v218 = vrot.slane %v217, 1
      %v219 = vmax.f32 %v217, %v218
      %v220 = vsel %vm205, %v203, -inf
      %v221 = vrot.slane %v220, 4
      %v222 = vmax.f32 %v220, %v221
      %v223 = vrot.slane %v222, 2
      %v224 = vmax.f32 %v222, %v223
      %v225 = vrot.slane %v224, 1
      %v226 = vmax.f32 %v224, %v225
      %v227 = vsel %vm205, %v204, -inf
      %v228 = vrot.slane %v227, 4
      %v229 = vmax.f32 %v227, %v228
      %v230 = vrot.slane %v229, 2
      %v231 = vmax.f32 %v229, %v230
      %v232 = vrot.slane %v231, 1
      %v233 = vmax.f32 %v231, %v232
      %v234 = vld [vmem:[%s2] sm:$0xff]
      %v235 = vld [vmem:[%s2 + $0x8] sm:$0xff]
      %v236 = vld [vmem:[%s2 + $0x10] sm:$0xff]
      %v237 = vld [vmem:[%s2 + $0x18] sm:$0xff]
      %v238 = vld [vmem:[%s2 + $0x20] sm:$0xff]
      %v239 = vld [vmem:[%s2 + $0x28] sm:$0xff]
      %v240 = vld [vmem:[%s2 + $0x30] sm:$0xff]
      %v241 = vld [vmem:[%s2 + $0x38] sm:$0xff]
      %v242 = vld [vmem:[%s2 + $0x40] sm:$0xff]
      %v243 = vld [vmem:[%s2 + $0x48] sm:$0xff]
      %v244 = vld [vmem:[%s2 + $0x50] sm:$0xff]
      %v245 = vld [vmem:[%s2 + $0x58] sm:$0xff]
      %v246 = vld [vmem:[%s2 + $0x60] sm:$0xff]
      %v247 = vld [vmem:[%s2 + $0x68] sm:$0xff]
      %v248 = vld [vmem:[%s2 + $0x70] sm:$0xff]
      %v249 = vld [vmem:[%s2 + $0x78] sm:$0xff]
      %v250 = vld [vmem:[%s186] sm:$0xff]
      %v251 = vld [vmem:[%s186 + $0x8] sm:$0xff]
      %v252 = vld [vmem:[%s186 + $0x10] sm:$0xff]
      %v253 = vld [vmem:[%s186 + $0x18] sm:$0xff]
      %v254 = vld [vmem:[%s186 + $0x20] sm:$0xff]
      %v255 = vld [vmem:[%s186 + $0x28] sm:$0xff]
      %v256 = vld [vmem:[%s186 + $0x30] sm:$0xff]
      %v257 = vld [vmem:[%s186 + $0x38] sm:$0xff]
      %v258 = vld [vmem:[%s186 + $0x40] sm:$0xff]
      %v259 = vld [vmem:[%s186 + $0x48] sm:$0xff]
      %v260 = vld [vmem:[%s186 + $0x50] sm:$0xff]
      %v261 = vld [vmem:[%s186 + $0x58] sm:$0xff]
      %v262 = vld [vmem:[%s186 + $0x60] sm:$0xff]
      %v263 = vld [vmem:[%s186 + $0x68] sm:$0xff]
      %v264 = vld [vmem:[%s186 + $0x70] sm:$0xff]
      %v265 = vld [vmem:[%s186 + $0x78] sm:$0xff]
      %v266 = vld [vmem:[%s186 + $0x80] sm:$0xff]
      %v267 = vld [vmem:[%s186 + $0x88] sm:$0xff]
      %v268 = vld [vmem:[%s186 + $0x90] sm:$0xff]
      %v269 = vld [vmem:[%s186 + $0x98] sm:$0xff]
      %v270 = vld [vmem:[%s186 + $0xa0] sm:$0xff]
      %v271 = vld [vmem:[%s186 + $0xa8] sm:$0xff]
      %v272 = vld [vmem:[%s186 + $0xb0] sm:$0xff]
      %v273 = vld [vmem:[%s186 + $0xb8] sm:$0xff]
      %v274 = vld [vmem:[%s186 + $0xc0] sm:$0xff]
      %v275 = vld [vmem:[%s186 + $0xc8] sm:$0xff]
      %v276 = vld [vmem:[%s186 + $0xd0] sm:$0xff]
      %v277 = vld [vmem:[%s186 + $0xd8] sm:$0xff]
      %v278 = vld [vmem:[%s186 + $0xe0] sm:$0xff]
      %v279 = vld [vmem:[%s186 + $0xe8] sm:$0xff]
      %v280 = vld [vmem:[%s186 + $0xf0] sm:$0xff]
      %v281 = vld [vmem:[%s186 + $0xf8] sm:$0xff]
      %v282 = vld [vmem:[%s186 + $0x100] sm:$0xff]
      %v283 = vld [vmem:[%s186 + $0x108] sm:$0xff]
      %v284 = vld [vmem:[%s186 + $0x110] sm:$0xff]
      %v285 = vld [vmem:[%s186 + $0x118] sm:$0xff]
      %v286 = vld [vmem:[%s186 + $0x120] sm:$0xff]
      %v287 = vld [vmem:[%s186 + $0x128] sm:$0xff]
      %v288 = vld [vmem:[%s186 + $0x130] sm:$0xff]
      %v289 = vld [vmem:[%s186 + $0x138] sm:$0xff]
      %v290 = vld [vmem:[%s186 + $0x140] sm:$0xff]
      %v291 = vld [vmem:[%s186 + $0x148] sm:$0xff]
      %v292 = vld [vmem:[%s186 + $0x150] sm:$0xff]
      %v293 = vld [vmem:[%s186 + $0x158] sm:$0xff]
      %v294 = vld [vmem:[%s186 + $0x160] sm:$0xff]
      %v295 = vld [vmem:[%s186 + $0x168] sm:$0xff]
      %v296 = vld [vmem:[%s186 + $0x170] sm:$0xff]
      %v297 = vld [vmem:[%s186 + $0x178] sm:$0xff]
      %v298 = vld [vmem:[%s186 + $0x180] sm:$0xff]
      %v299 = vld [vmem:[%s186 + $0x188] sm:$0xff]
      %v300 = vld [vmem:[%s186 + $0x190] sm:$0xff]
      %v301 = vld [vmem:[%s186 + $0x198] sm:$0xff]
      %v302 = vld [vmem:[%s186 + $0x1a0] sm:$0xff]
      %v303 = vld [vmem:[%s186 + $0x1a8] sm:$0xff]
      %v304 = vld [vmem:[%s186 + $0x1b0] sm:$0xff]
      %v305 = vld [vmem:[%s186 + $0x1b8] sm:$0xff]
      %v306 = vld [vmem:[%s186 + $0x1c0] sm:$0xff]
      %v307 = vld [vmem:[%s186 + $0x1c8] sm:$0xff]
      %v308 = vld [vmem:[%s186 + $0x1d0] sm:$0xff]
      %v309 = vld [vmem:[%s186 + $0x1d8] sm:$0xff]
      %v310 = vld [vmem:[%s186 + $0x1e0] sm:$0xff]
      %v311 = vld [vmem:[%s186 + $0x1e8] sm:$0xff]
      %v312 = vld [vmem:[%s186 + $0x1f0] sm:$0xff]
      %v313 = vld [vmem:[%s186 + $0x1f8] sm:$0xff]
      %v314 = vlaneseq
      %v315 = vand.u32 %v314, 127
      %vm316 = vcmp.lt.s32.totalorder %v315, 0
      %v317 = vsub.s32 0, %v315
      %v318 = vsel %vm316, %v317, %v315
      %v319 = vshrl.u32 %v318, 1
      %v320 = vand.u32 %v318, 1
      %v321 = vsub.s32 0, %v320
      %v322 = vsel %vm316, %v321, %v320
      %vm323 = vcmp.ne.s32.totalorder %v322, 0
      %vm324 = vcmp.lt.s32.totalorder %v322, 0
      %vm325 = vmand %vm324, %vm323
      %v326 = vadd.s32 %v322, 2
      %v327 = vsel %vm325, %v326, %v322
      %vm328 = vcmp.eq.s32.totalorder %v327, 0
      %v329 = vsel %vm328, 1, 0
      %vm330 = vcmp.eq.s32.totalorder %v329, 1
      %332 = vset.pattern.permute.xlu0 0
      %333 = vperm.xlu0 %332, %v250
      %v334 = vpop.permute.xlu0 %333
      %337 = vset.pattern.permute.xlu0 0
      %338 = vperm.xlu0 %337, %v251
      %v339 = vpop.permute.xlu0 %338
      %342 = vset.pattern.permute.xlu0 0
      %343 = vperm.xlu0 %342, %v252
      %v344 = vpop.permute.xlu0 %343
      %347 = vset.pattern.permute.xlu0 0
      %348 = vperm.xlu0 %347, %v253
      %v349 = vpop.permute.xlu0 %348
      %352 = vset.pattern.permute.xlu0 0
      %353 = vperm.xlu0 %352, %v254
      %v354 = vpop.permute.xlu0 %353
      %357 = vset.pattern.permute.xlu0 0
      %358 = vperm.xlu0 %357, %v255
      %v359 = vpop.permute.xlu0 %358
      %362 = vset.pattern.permute.xlu0 0
      %363 = vperm.xlu0 %362, %v256
      %v364 = vpop.permute.xlu0 %363
      %367 = vset.pattern.permute.xlu0 0
      %368 = vperm.xlu0 %367, %v257
      %v369 = vpop.permute.xlu0 %368
      %372 = vset.pattern.permute.xlu0 0
      %373 = vperm.xlu0 %372, %v258
      %v374 = vpop.permute.xlu0 %373
      %377 = vset.pattern.permute.xlu0 0
      %378 = vperm.xlu0 %377, %v259
      %v379 = vpop.permute.xlu0 %378
      %382 = vset.pattern.permute.xlu0 0
      %383 = vperm.xlu0 %382, %v260
      %v384 = vpop.permute.xlu0 %383
      %387 = vset.pattern.permute.xlu0 0
      %388 = vperm.xlu0 %387, %v261
      %v389 = vpop.permute.xlu0 %388
      %392 = vset.pattern.permute.xlu0 0
      %393 = vperm.xlu0 %392, %v262
      %v394 = vpop.permute.xlu0 %393
      %397 = vset.pattern.permute.xlu0 0
      %398 = vperm.xlu0 %397, %v263
      %v399 = vpop.permute.xlu0 %398
      %402 = vset.pattern.permute.xlu0 0
      %403 = vperm.xlu0 %402, %v264
      %v404 = vpop.permute.xlu0 %403
      %407 = vset.pattern.permute.xlu0 0
      %408 = vperm.xlu0 %407, %v265
      %v409 = vpop.permute.xlu0 %408
      %412 = vset.pattern.permute.xlu0 0
      %413 = vperm.xlu0 %412, %v266
      %v414 = vpop.permute.xlu0 %413
      %417 = vset.pattern.permute.xlu0 0
      %418 = vperm.xlu0 %417, %v267
      %v419 = vpop.permute.xlu0 %418
      %422 = vset.pattern.permute.xlu0 0
      %423 = vperm.xlu0 %422, %v268
      %v424 = vpop.permute.xlu0 %423
      %427 = vset.pattern.permute.xlu0 0
      %428 = vperm.xlu0 %427, %v269
      %v429 = vpop.permute.xlu0 %428
      %432 = vset.pattern.permute.xlu0 0
      %433 = vperm.xlu0 %432, %v270
      %v434 = vpop.permute.xlu0 %433
      %437 = vset.pattern.permute.xlu0 0
      %438 = vperm.xlu0 %437, %v271
      %v439 = vpop.permute.xlu0 %438
      %442 = vset.pattern.permute.xlu0 0
      %443 = vperm.xlu0 %442, %v272
      %v444 = vpop.permute.xlu0 %443
      %447 = vset.pattern.permute.xlu0 0
      %448 = vperm.xlu0 %447, %v273
      %v449 = vpop.permute.xlu0 %448
      %452 = vset.pattern.permute.xlu0 0
      %453 = vperm.xlu0 %452, %v274
      %v454 = vpop.permute.xlu0 %453
      %457 = vset.pattern.permute.xlu0 0
      %458 = vperm.xlu0 %457, %v275
      %v459 = vpop.permute.xlu0 %458
      %462 = vset.pattern.permute.xlu0 0
      %463 = vperm.xlu0 %462, %v276
      %v464 = vpop.permute.xlu0 %463
      %467 = vset.pattern.permute.xlu0 0
      %468 = vperm.xlu0 %467, %v277
      %v469 = vpop.permute.xlu0 %468
      %472 = vset.pattern.permute.xlu0 0
      %473 = vperm.xlu0 %472, %v278
      %v474 = vpop.permute.xlu0 %473
      %477 = vset.pattern.permute.xlu0 0
      %478 = vperm.xlu0 %477, %v279
      %v479 = vpop.permute.xlu0 %478
      %482 = vset.pattern.permute.xlu0 0
      %483 = vperm.xlu0 %482, %v280
      %v484 = vpop.permute.xlu0 %483
      %487 = vset.pattern.permute.xlu0 0
      %488 = vperm.xlu0 %487, %v281
      %v489 = vpop.permute.xlu0 %488
      %492 = vset.pattern.permute.xlu0 0
      %493 = vperm.xlu0 %492, %v282
      %v494 = vpop.permute.xlu0 %493
      %497 = vset.pattern.permute.xlu0 0
      %498 = vperm.xlu0 %497, %v283
      %v499 = vpop.permute.xlu0 %498
      %502 = vset.pattern.permute.xlu0 0
      %503 = vperm.xlu0 %502, %v284
      %v504 = vpop.permute.xlu0 %503
      %507 = vset.pattern.permute.xlu0 0
      %508 = vperm.xlu0 %507, %v285
      %v509 = vpop.permute.xlu0 %508
      %512 = vset.pattern.permute.xlu0 0
      %513 = vperm.xlu0 %512, %v286
      %v514 = vpop.permute.xlu0 %513
      %517 = vset.pattern.permute.xlu0 0
      %518 = vperm.xlu0 %517, %v287
      %v519 = vpop.permute.xlu0 %518
      %522 = vset.pattern.permute.xlu0 0
      %523 = vperm.xlu0 %522, %v288
      %v524 = vpop.permute.xlu0 %523
      %527 = vset.pattern.permute.xlu0 0
      %528 = vperm.xlu0 %527, %v289
      %v529 = vpop.permute.xlu0 %528
      %532 = vset.pattern.permute.xlu0 0
      %533 = vperm.xlu0 %532, %v290
      %v534 = vpop.permute.xlu0 %533
      %537 = vset.pattern.permute.xlu0 0
      %538 = vperm.xlu0 %537, %v291
      %v539 = vpop.permute.xlu0 %538
      %542 = vset.pattern.permute.xlu0 0
      %543 = vperm.xlu0 %542, %v292
      %v544 = vpop.permute.xlu0 %543
      %547 = vset.pattern.permute.xlu0 0
      %548 = vperm.xlu0 %547, %v293
      %v549 = vpop.permute.xlu0 %548
      %552 = vset.pattern.permute.xlu0 0
      %553 = vperm.xlu0 %552, %v294
      %v554 = vpop.permute.xlu0 %553
      %557 = vset.pattern.permute.xlu0 0
      %558 = vperm.xlu0 %557, %v295
      %v559 = vpop.permute.xlu0 %558
      %562 = vset.pattern.permute.xlu0 0
      %563 = vperm.xlu0 %562, %v296
      %v564 = vpop.permute.xlu0 %563
      %567 = vset.pattern.permute.xlu0 0
      %568 = vperm.xlu0 %567, %v297
      %v569 = vpop.permute.xlu0 %568
      %572 = vset.pattern.permute.xlu0 0
      %573 = vperm.xlu0 %572, %v298
      %v574 = vpop.permute.xlu0 %573
      %577 = vset.pattern.permute.xlu0 0
      %578 = vperm.xlu0 %577, %v299
      %v579 = vpop.permute.xlu0 %578
      %582 = vset.pattern.permute.xlu0 0
      %583 = vperm.xlu0 %582, %v300
      %v584 = vpop.permute.xlu0 %583
      %587 = vset.pattern.permute.xlu0 0
      %588 = vperm.xlu0 %587, %v301
      %v589 = vpop.permute.xlu0 %588
      %592 = vset.pattern.permute.xlu0 0
      %593 = vperm.xlu0 %592, %v302
      %v594 = vpop.permute.xlu0 %593
      %597 = vset.pattern.permute.xlu0 0
      %598 = vperm.xlu0 %597, %v303
      %v599 = vpop.permute.xlu0 %598
      %602 = vset.pattern.permute.xlu0 0
      %603 = vperm.xlu0 %602, %v304
      %v604 = vpop.permute.xlu0 %603
      %607 = vset.pattern.permute.xlu0 0
      %608 = vperm.xlu0 %607, %v305
      %v609 = vpop.permute.xlu0 %608
      %612 = vset.pattern.permute.xlu0 0
      %613 = vperm.xlu0 %612, %v306
      %v614 = vpop.permute.xlu0 %613
      %617 = vset.pattern.permute.xlu0 0
      %618 = vperm.xlu0 %617, %v307
      %v619 = vpop.permute.xlu0 %618
      %622 = vset.pattern.permute.xlu0 0
      %623 = vperm.xlu0 %622, %v308
      %v624 = vpop.permute.xlu0 %623
      %627 = vset.pattern.permute.xlu0 0
      %628 = vperm.xlu0 %627, %v309
      %v629 = vpop.permute.xlu0 %628
      %632 = vset.pattern.permute.xlu0 0
      %633 = vperm.xlu0 %632, %v310
      %v634 = vpop.permute.xlu0 %633
      %637 = vset.pattern.permute.xlu0 0
      %638 = vperm.xlu0 %637, %v311
      %v639 = vpop.permute.xlu0 %638
      %642 = vset.pattern.permute.xlu0 0
      %643 = vperm.xlu0 %642, %v312
      %v644 = vpop.permute.xlu0 %643
      %647 = vset.pattern.permute.xlu0 0
      %648 = vperm.xlu0 %647, %v313
      %v649 = vpop.permute.xlu0 %648
      %651 = vset.pattern.permute.xlu0 1
      %652 = vperm.xlu0 %651, %v250
      %v653 = vpop.permute.xlu0 %652
      %655 = vset.pattern.permute.xlu0 1
      %656 = vperm.xlu0 %655, %v251
      %v657 = vpop.permute.xlu0 %656
      %659 = vset.pattern.permute.xlu0 1
      %660 = vperm.xlu0 %659, %v252
      %v661 = vpop.permute.xlu0 %660
      %663 = vset.pattern.permute.xlu0 1
      %664 = vperm.xlu0 %663, %v253
      %v665 = vpop.permute.xlu0 %664
      %667 = vset.pattern.permute.xlu0 1
      %668 = vperm.xlu0 %667, %v254
      %v669 = vpop.permute.xlu0 %668
      %671 = vset.pattern.permute.xlu0 1
      %672 = vperm.xlu0 %671, %v255
      %v673 = vpop.permute.xlu0 %672
      %675 = vset.pattern.permute.xlu0 1
      %676 = vperm.xlu0 %675, %v256
      %v677 = vpop.permute.xlu0 %676
      %679 = vset.pattern.permute.xlu0 1
      %680 = vperm.xlu0 %679, %v257
      %v681 = vpop.permute.xlu0 %680
      %683 = vset.pattern.permute.xlu0 1
      %684 = vperm.xlu0 %683, %v258
      %v685 = vpop.permute.xlu0 %684
      %687 = vset.pattern.permute.xlu0 1
      %688 = vperm.xlu0 %687, %v259
      %v689 = vpop.permute.xlu0 %688
      %691 = vset.pattern.permute.xlu0 1
      %692 = vperm.xlu0 %691, %v260
      %v693 = vpop.permute.xlu0 %692
      %695 = vset.pattern.permute.xlu0 1
      %696 = vperm.xlu0 %695, %v261
      %v697 = vpop.permute.xlu0 %696
      %699 = vset.pattern.permute.xlu0 1
      %700 = vperm.xlu0 %699, %v262
      %v701 = vpop.permute.xlu0 %700
      %703 = vset.pattern.permute.xlu0 1
      %704 = vperm.xlu0 %703, %v263
      %v705 = vpop.permute.xlu0 %704
      %707 = vset.pattern.permute.xlu0 1
      %708 = vperm.xlu0 %707, %v264
      %v709 = vpop.permute.xlu0 %708
      %711 = vset.pattern.permute.xlu0 1
      %712 = vperm.xlu0 %711, %v265
      %v713 = vpop.permute.xlu0 %712
      %715 = vset.pattern.permute.xlu0 1
      %716 = vperm.xlu0 %715, %v266
      %v717 = vpop.permute.xlu0 %716
      %719 = vset.pattern.permute.xlu0 1
      %720 = vperm.xlu0 %719, %v267
      %v721 = vpop.permute.xlu0 %720
      %723 = vset.pattern.permute.xlu0 1
      %724 = vperm.xlu0 %723, %v268
      %v725 = vpop.permute.xlu0 %724
      %727 = vset.pattern.permute.xlu0 1
      %728 = vperm.xlu0 %727, %v269
      %v729 = vpop.permute.xlu0 %728
      %731 = vset.pattern.permute.xlu0 1
      %732 = vperm.xlu0 %731, %v270
      %v733 = vpop.permute.xlu0 %732
      %735 = vset.pattern.permute.xlu0 1
      %736 = vperm.xlu0 %735, %v271
      %v737 = vpop.permute.xlu0 %736
      %739 = vset.pattern.permute.xlu0 1
      %740 = vperm.xlu0 %739, %v272
      %v741 = vpop.permute.xlu0 %740
      %743 = vset.pattern.permute.xlu0 1
      %744 = vperm.xlu0 %743, %v273
      %v745 = vpop.permute.xlu0 %744
      %747 = vset.pattern.permute.xlu0 1
      %748 = vperm.xlu0 %747, %v274
      %v749 = vpop.permute.xlu0 %748
      %751 = vset.pattern.permute.xlu0 1
      %752 = vperm.xlu0 %751, %v275
      %v753 = vpop.permute.xlu0 %752
      %755 = vset.pattern.permute.xlu0 1
      %756 = vperm.xlu0 %755, %v276
      %v757 = vpop.permute.xlu0 %756
      %759 = vset.pattern.permute.xlu0 1
      %760 = vperm.xlu0 %759, %v277
      %v761 = vpop.permute.xlu0 %760
      %763 = vset.pattern.permute.xlu0 1
      %764 = vperm.xlu0 %763, %v278
      %v765 = vpop.permute.xlu0 %764
      %767 = vset.pattern.permute.xlu0 1
      %768 = vperm.xlu0 %767, %v279
      %v769 = vpop.permute.xlu0 %768
      %771 = vset.pattern.permute.xlu0 1
      %772 = vperm.xlu0 %771, %v280
      %v773 = vpop.permute.xlu0 %772
      %775 = vset.pattern.permute.xlu0 1
      %776 = vperm.xlu0 %775, %v281
      %v777 = vpop.permute.xlu0 %776
      %779 = vset.pattern.permute.xlu0 1
      %780 = vperm.xlu0 %779, %v282
      %v781 = vpop.permute.xlu0 %780
      %783 = vset.pattern.permute.xlu0 1
      %784 = vperm.xlu0 %783, %v283
      %v785 = vpop.permute.xlu0 %784
      %787 = vset.pattern.permute.xlu0 1
      %788 = vperm.xlu0 %787, %v284
      %v789 = vpop.permute.xlu0 %788
      %791 = vset.pattern.permute.xlu0 1
      %792 = vperm.xlu0 %791, %v285
      %v793 = vpop.permute.xlu0 %792
      %795 = vset.pattern.permute.xlu0 1
      %796 = vperm.xlu0 %795, %v286
      %v797 = vpop.permute.xlu0 %796
      %799 = vset.pattern.permute.xlu0 1
      %800 = vperm.xlu0 %799, %v287
      %v801 = vpop.permute.xlu0 %800
      %803 = vset.pattern.permute.xlu0 1
      %804 = vperm.xlu0 %803, %v288
      %v805 = vpop.permute.xlu0 %804
      %807 = vset.pattern.permute.xlu0 1
      %808 = vperm.xlu0 %807, %v289
      %v809 = vpop.permute.xlu0 %808
      %811 = vset.pattern.permute.xlu0 1
      %812 = vperm.xlu0 %811, %v290
      %v813 = vpop.permute.xlu0 %812
      %815 = vset.pattern.permute.xlu0 1
      %816 = vperm.xlu0 %815, %v291
      %v817 = vpop.permute.xlu0 %816
      %819 = vset.pattern.permute.xlu0 1
      %820 = vperm.xlu0 %819, %v292
      %v821 = vpop.permute.xlu0 %820
      %823 = vset.pattern.permute.xlu0 1
      %824 = vperm.xlu0 %823, %v293
      %v825 = vpop.permute.xlu0 %824
      %827 = vset.pattern.permute.xlu0 1
      %828 = vperm.xlu0 %827, %v294
      %v829 = vpop.permute.xlu0 %828
      %831 = vset.pattern.permute.xlu0 1
      %832 = vperm.xlu0 %831, %v295
      %v833 = vpop.permute.xlu0 %832
      %835 = vset.pattern.permute.xlu0 1
      %836 = vperm.xlu0 %835, %v296
      %v837 = vpop.permute.xlu0 %836
      %839 = vset.pattern.permute.xlu0 1
      %840 = vperm.xlu0 %839, %v297
      %v841 = vpop.permute.xlu0 %840
      %843 = vset.pattern.permute.xlu0 1
      %844 = vperm.xlu0 %843, %v298
      %v845 = vpop.permute.xlu0 %844
      %847 = vset.pattern.permute.xlu0 1
      %848 = vperm.xlu0 %847, %v299
      %v849 = vpop.permute.xlu0 %848
      %851 = vset.pattern.permute.xlu0 1
      %852 = vperm.xlu0 %851, %v300
      %v853 = vpop.permute.xlu0 %852
      %855 = vset.pattern.permute.xlu0 1
      %856 = vperm.xlu0 %855, %v301
      %v857 = vpop.permute.xlu0 %856
      %859 = vset.pattern.permute.xlu0 1
      %860 = vperm.xlu0 %859, %v302
      %v861 = vpop.permute.xlu0 %860
      %863 = vset.pattern.permute.xlu0 1
      %864 = vperm.xlu0 %863, %v303
      %v865 = vpop.permute.xlu0 %864
      %867 = vset.pattern.permute.xlu0 1
      %868 = vperm.xlu0 %867, %v304
      %v869 = vpop.permute.xlu0 %868
      %871 = vset.pattern.permute.xlu0 1
      %872 = vperm.xlu0 %871, %v305
      %v873 = vpop.permute.xlu0 %872
      %875 = vset.pattern.permute.xlu0 1
      %876 = vperm.xlu0 %875, %v306
      %v877 = vpop.permute.xlu0 %876
      %879 = vset.pattern.permute.xlu0 1
      %880 = vperm.xlu0 %879, %v307
      %v881 = vpop.permute.xlu0 %880
      %883 = vset.pattern.permute.xlu0 1
      %884 = vperm.xlu0 %883, %v308
      %v885 = vpop.permute.xlu0 %884
      %887 = vset.pattern.permute.xlu0 1
      %888 = vperm.xlu0 %887, %v309
      %v889 = vpop.permute.xlu0 %888
      %891 = vset.pattern.permute.xlu0 1
      %892 = vperm.xlu0 %891, %v310
      %v893 = vpop.permute.xlu0 %892
      %895 = vset.pattern.permute.xlu0 1
      %896 = vperm.xlu0 %895, %v311
      %v897 = vpop.permute.xlu0 %896
      %899 = vset.pattern.permute.xlu0 1
      %900 = vperm.xlu0 %899, %v312
      %v901 = vpop.permute.xlu0 %900
      %903 = vset.pattern.permute.xlu0 1
      %904 = vperm.xlu0 %903, %v313
      %v905 = vpop.permute.xlu0 %904
      %v907 = vsel %vm330, %v334, %v653
      %v908 = vsel %vm330, %v339, %v657
      %v909 = vsel %vm330, %v344, %v661
      %v910 = vsel %vm330, %v349, %v665
      %v911 = vsel %vm330, %v354, %v669
      %v912 = vsel %vm330, %v359, %v673
      %v913 = vsel %vm330, %v364, %v677
      %v914 = vsel %vm330, %v369, %v681
      %v915 = vsel %vm330, %v374, %v685
      %v916 = vsel %vm330, %v379, %v689
      %v917 = vsel %vm330, %v384, %v693
      %v918 = vsel %vm330, %v389, %v697
      %v919 = vsel %vm330, %v394, %v701
      %v920 = vsel %vm330, %v399, %v705
      %v921 = vsel %vm330, %v404, %v709
      %v922 = vsel %vm330, %v409, %v713
      %v923 = vsel %vm330, %v414, %v717
      %v924 = vsel %vm330, %v419, %v721
      %v925 = vsel %vm330, %v424, %v725
      %v926 = vsel %vm330, %v429, %v729
      %v927 = vsel %vm330, %v434, %v733
      %v928 = vsel %vm330, %v439, %v737
      %v929 = vsel %vm330, %v444, %v741
      %v930 = vsel %vm330, %v449, %v745
      %v931 = vsel %vm330, %v454, %v749
      %v932 = vsel %vm330, %v459, %v753
      %v933 = vsel %vm330, %v464, %v757
      %v934 = vsel %vm330, %v469, %v761
      %v935 = vsel %vm330, %v474, %v765
      %v936 = vsel %vm330, %v479, %v769
      %v937 = vsel %vm330, %v484, %v773
      %v938 = vsel %vm330, %v489, %v777
      %v939 = vsel %vm330, %v494, %v781
      %v940 = vsel %vm330, %v499, %v785
      %v941 = vsel %vm330, %v504, %v789
      %v942 = vsel %vm330, %v509, %v793
      %v943 = vsel %vm330, %v514, %v797
      %v944 = vsel %vm330, %v519, %v801
      %v945 = vsel %vm330, %v524, %v805
      %v946 = vsel %vm330, %v529, %v809
      %v947 = vsel %vm330, %v534, %v813
      %v948 = vsel %vm330, %v539, %v817
      %v949 = vsel %vm330, %v544, %v821
      %v950 = vsel %vm330, %v549, %v825
      %v951 = vsel %vm330, %v554, %v829
      %v952 = vsel %vm330, %v559, %v833
      %v953 = vsel %vm330, %v564, %v837
      %v954 = vsel %vm330, %v569, %v841
      %v955 = vsel %vm330, %v574, %v845
      %v956 = vsel %vm330, %v579, %v849
      %v957 = vsel %vm330, %v584, %v853
      %v958 = vsel %vm330, %v589, %v857
      %v959 = vsel %vm330, %v594, %v861
      %v960 = vsel %vm330, %v599, %v865
      %v961 = vsel %vm330, %v604, %v869
      %v962 = vsel %vm330, %v609, %v873
      %v963 = vsel %vm330, %v614, %v877
      %v964 = vsel %vm330, %v619, %v881
      %v965 = vsel %vm330, %v624, %v885
      %v966 = vsel %vm330, %v629, %v889
      %v967 = vsel %vm330, %v634, %v893
      %v968 = vsel %vm330, %v639, %v897
      %v969 = vsel %vm330, %v644, %v901
      %v970 = vsel %vm330, %v649, %v905
      %972 = vset.pattern.permute.xlu0 0
      %973 = vperm.xlu0 %972, %v234
      %v974 = vpop.permute.xlu0 %973
      %977 = vset.pattern.permute.xlu0 0
      %978 = vperm.xlu0 %977, %v235
      %v979 = vpop.permute.xlu0 %978
      %982 = vset.pattern.permute.xlu0 0
      %983 = vperm.xlu0 %982, %v236
      %v984 = vpop.permute.xlu0 %983
      %987 = vset.pattern.permute.xlu0 0
      %988 = vperm.xlu0 %987, %v237
      %v989 = vpop.permute.xlu0 %988
      %992 = vset.pattern.permute.xlu0 0
      %993 = vperm.xlu0 %992, %v238
      %v994 = vpop.permute.xlu0 %993
      %997 = vset.pattern.permute.xlu0 0
      %998 = vperm.xlu0 %997, %v239
      %v999 = vpop.permute.xlu0 %998
      %1002 = vset.pattern.permute.xlu0 0
      %1003 = vperm.xlu0 %1002, %v240
      %v1004 = vpop.permute.xlu0 %1003
      %1007 = vset.pattern.permute.xlu0 0
      %1008 = vperm.xlu0 %1007, %v241
      %v1009 = vpop.permute.xlu0 %1008
      %1012 = vset.pattern.permute.xlu0 0
      %1013 = vperm.xlu0 %1012, %v242
      %v1014 = vpop.permute.xlu0 %1013
      %1017 = vset.pattern.permute.xlu0 0
      %1018 = vperm.xlu0 %1017, %v243
      %v1019 = vpop.permute.xlu0 %1018
      %1022 = vset.pattern.permute.xlu0 0
      %1023 = vperm.xlu0 %1022, %v244
      %v1024 = vpop.permute.xlu0 %1023
      %1027 = vset.pattern.permute.xlu0 0
      %1028 = vperm.xlu0 %1027, %v245
      %v1029 = vpop.permute.xlu0 %1028
      %1032 = vset.pattern.permute.xlu0 0
      %1033 = vperm.xlu0 %1032, %v246
      %v1034 = vpop.permute.xlu0 %1033
      %1037 = vset.pattern.permute.xlu0 0
      %1038 = vperm.xlu0 %1037, %v247
      %v1039 = vpop.permute.xlu0 %1038
      %1042 = vset.pattern.permute.xlu0 0
      %1043 = vperm.xlu0 %1042, %v248
      %v1044 = vpop.permute.xlu0 %1043
      %1047 = vset.pattern.permute.xlu0 0
      %1048 = vperm.xlu0 %1047, %v249
      %v1049 = vpop.permute.xlu0 %1048
      %v1051 = vlaneseq
      %v1052 = vshrl.u32 %v1051, 7
      %v1053 = vsub.s32 0, %v1052
      %v1054 = vrot.slane %v201, %v1053
      %v1055 = vlaneseq
      %v1056 = vshrl.u32 %v1055, 7
      %v1057 = vsub.s32 0, %v1056
      %v1058 = vrot.slane %v202, %v1057
      %v1059 = vlaneseq
      %v1060 = vshrl.u32 %v1059, 7
      %v1061 = vsub.s32 0, %v1060
      %v1062 = vrot.slane %v203, %v1061
      %v1063 = vlaneseq
      %v1064 = vshrl.u32 %v1063, 7
      %v1065 = vsub.s32 0, %v1064
      %v1066 = vrot.slane %v204, %v1065
      %v1067 = vmul.f32 %v974, %v1054
      %v1068 = vmul.f32 %v979, %v1054
      %v1069 = vmul.f32 %v984, %v1054
      %v1070 = vmul.f32 %v989, %v1054
      %v1071 = vmul.f32 %v994, %v1054
      %v1072 = vmul.f32 %v999, %v1054
      %v1073 = vmul.f32 %v1004, %v1054
      %v1074 = vmul.f32 %v1009, %v1054
      %v1075 = vmul.f32 %v1014, %v1054
      %v1076 = vmul.f32 %v1019, %v1054
      %v1077 = vmul.f32 %v1024, %v1054
      %v1078 = vmul.f32 %v1029, %v1054
      %v1079 = vmul.f32 %v1034, %v1054
      %v1080 = vmul.f32 %v1039, %v1054
      %v1081 = vmul.f32 %v1044, %v1054
      %v1082 = vmul.f32 %v1049, %v1054
      %v1083 = vmul.f32 %v974, %v1058
      %v1084 = vmul.f32 %v979, %v1058
      %v1085 = vmul.f32 %v984, %v1058
      %v1086 = vmul.f32 %v989, %v1058
      %v1087 = vmul.f32 %v994, %v1058
      %v1088 = vmul.f32 %v999, %v1058
      %v1089 = vmul.f32 %v1004, %v1058
      %v1090 = vmul.f32 %v1009, %v1058
      %v1091 = vmul.f32 %v1014, %v1058
      %v1092 = vmul.f32 %v1019, %v1058
      %v1093 = vmul.f32 %v1024, %v1058
      %v1094 = vmul.f32 %v1029, %v1058
      %v1095 = vmul.f32 %v1034, %v1058
      %v1096 = vmul.f32 %v1039, %v1058
      %v1097 = vmul.f32 %v1044, %v1058
      %v1098 = vmul.f32 %v1049, %v1058
      %v1099 = vmul.f32 %v974, %v1062
      %v1100 = vmul.f32 %v979, %v1062
      %v1101 = vmul.f32 %v984, %v1062
      %v1102 = vmul.f32 %v989, %v1062
      %v1103 = vmul.f32 %v994, %v1062
      %v1104 = vmul.f32 %v999, %v1062
      %v1105 = vmul.f32 %v1004, %v1062
      %v1106 = vmul.f32 %v1009, %v1062
      %v1107 = vmul.f32 %v1014, %v1062
      %v1108 = vmul.f32 %v1019, %v1062
      %v1109 = vmul.f32 %v1024, %v1062
      %v1110 = vmul.f32 %v1029, %v1062
      %v1111 = vmul.f32 %v1034, %v1062
      %v1112 = vmul.f32 %v1039, %v1062
      %v1113 = vmul.f32 %v1044, %v1062
      %v1114 = vmul.f32 %v1049, %v1062
      %v1115 = vmul.f32 %v974, %v1066
      %v1116 = vmul.f32 %v979, %v1066
      %v1117 = vmul.f32 %v984, %v1066
      %v1118 = vmul.f32 %v989, %v1066
      %v1119 = vmul.f32 %v994, %v1066
      %v1120 = vmul.f32 %v999, %v1066
      %v1121 = vmul.f32 %v1004, %v1066
      %v1122 = vmul.f32 %v1009, %v1066
      %v1123 = vmul.f32 %v1014, %v1066
      %v1124 = vmul.f32 %v1019, %v1066
      %v1125 = vmul.f32 %v1024, %v1066
      %v1126 = vmul.f32 %v1029, %v1066
      %v1127 = vmul.f32 %v1034, %v1066
      %v1128 = vmul.f32 %v1039, %v1066
      %v1129 = vmul.f32 %v1044, %v1066
      %v1130 = vmul.f32 %v1049, %v1066
      %1131 = vset.pattern.permute.xlu0 1
      %1132 = vperm.xlu0 %1131, %v234
      %v1133 = vpop.permute.xlu0 %1132
      %1135 = vset.pattern.permute.xlu0 1
      %1136 = vperm.xlu0 %1135, %v235
      %v1137 = vpop.permute.xlu0 %1136
      %1139 = vset.pattern.permute.xlu0 1
      %1140 = vperm.xlu0 %1139, %v236
      %v1141 = vpop.permute.xlu0 %1140
      %1143 = vset.pattern.permute.xlu0 1
      %1144 = vperm.xlu0 %1143, %v237
      %v1145 = vpop.permute.xlu0 %1144
      %1147 = vset.pattern.permute.xlu0 1
      %1148 = vperm.xlu0 %1147, %v238
      %v1149 = vpop.permute.xlu0 %1148
      %1151 = vset.pattern.permute.xlu0 1
      %1152 = vperm.xlu0 %1151, %v239
      %v1153 = vpop.permute.xlu0 %1152
      %1155 = vset.pattern.permute.xlu0 1
      %1156 = vperm.xlu0 %1155, %v240
      %v1157 = vpop.permute.xlu0 %1156
      %1159 = vset.pattern.permute.xlu0 1
      %1160 = vperm.xlu0 %1159, %v241
      %v1161 = vpop.permute.xlu0 %1160
      %1163 = vset.pattern.permute.xlu0 1
      %1164 = vperm.xlu0 %1163, %v242
      %v1165 = vpop.permute.xlu0 %1164
      %1167 = vset.pattern.permute.xlu0 1
      %1168 = vperm.xlu0 %1167, %v243
      %v1169 = vpop.permute.xlu0 %1168
      %1171 = vset.pattern.permute.xlu0 1
      %1172 = vperm.xlu0 %1171, %v244
      %v1173 = vpop.permute.xlu0 %1172
      %1175 = vset.pattern.permute.xlu0 1
      %1176 = vperm.xlu0 %1175, %v245
      %v1177 = vpop.permute.xlu0 %1176
      %1179 = vset.pattern.permute.xlu0 1
      %1180 = vperm.xlu0 %1179, %v246
      %v1181 = vpop.permute.xlu0 %1180
      %1183 = vset.pattern.permute.xlu0 1
      %1184 = vperm.xlu0 %1183, %v247
      %v1185 = vpop.permute.xlu0 %1184
      %1187 = vset.pattern.permute.xlu0 1
      %1188 = vperm.xlu0 %1187, %v248
      %v1189 = vpop.permute.xlu0 %1188
      %1191 = vset.pattern.permute.xlu0 1
      %1192 = vperm.xlu0 %1191, %v249
      %v1193 = vpop.permute.xlu0 %1192
      %v1195 = vadd.f32 %v1067, %v1133
      %v1196 = vadd.f32 %v1068, %v1137
      %v1197 = vadd.f32 %v1069, %v1141
      %v1198 = vadd.f32 %v1070, %v1145
      %v1199 = vadd.f32 %v1071, %v1149
      %v1200 = vadd.f32 %v1072, %v1153
      %v1201 = vadd.f32 %v1073, %v1157
      %v1202 = vadd.f32 %v1074, %v1161
      %v1203 = vadd.f32 %v1075, %v1165
      %v1204 = vadd.f32 %v1076, %v1169
      %v1205 = vadd.f32 %v1077, %v1173
      %v1206 = vadd.f32 %v1078, %v1177
      %v1207 = vadd.f32 %v1079, %v1181
      %v1208 = vadd.f32 %v1080, %v1185
      %v1209 = vadd.f32 %v1081, %v1189
      %v1210 = vadd.f32 %v1082, %v1193
      %v1211 = vadd.f32 %v1083, %v1133
      %v1212 = vadd.f32 %v1084, %v1137
      %v1213 = vadd.f32 %v1085, %v1141
      %v1214 = vadd.f32 %v1086, %v1145
      %v1215 = vadd.f32 %v1087, %v1149
      %v1216 = vadd.f32 %v1088, %v1153
      %v1217 = vadd.f32 %v1089, %v1157
      %v1218 = vadd.f32 %v1090, %v1161
      %v1219 = vadd.f32 %v1091, %v1165
      %v1220 = vadd.f32 %v1092, %v1169
      %v1221 = vadd.f32 %v1093, %v1173
      %v1222 = vadd.f32 %v1094, %v1177
      %v1223 = vadd.f32 %v1095, %v1181
      %v1224 = vadd.f32 %v1096, %v1185
      %v1225 = vadd.f32 %v1097, %v1189
      %v1226 = vadd.f32 %v1098, %v1193
      %v1227 = vadd.f32 %v1099, %v1133
      %v1228 = vadd.f32 %v1100, %v1137
      %v1229 = vadd.f32 %v1101, %v1141
      %v1230 = vadd.f32 %v1102, %v1145
      %v1231 = vadd.f32 %v1103, %v1149
      %v1232 = vadd.f32 %v1104, %v1153
      %v1233 = vadd.f32 %v1105, %v1157
      %v1234 = vadd.f32 %v1106, %v1161
      %v1235 = vadd.f32 %v1107, %v1165
      %v1236 = vadd.f32 %v1108, %v1169
      %v1237 = vadd.f32 %v1109, %v1173
      %v1238 = vadd.f32 %v1110, %v1177
      %v1239 = vadd.f32 %v1111, %v1181
      %v1240 = vadd.f32 %v1112, %v1185
      %v1241 = vadd.f32 %v1113, %v1189
      %v1242 = vadd.f32 %v1114, %v1193
      %v1243 = vadd.f32 %v1115, %v1133
      %v1244 = vadd.f32 %v1116, %v1137
      %v1245 = vadd.f32 %v1117, %v1141
      %v1246 = vadd.f32 %v1118, %v1145
      %v1247 = vadd.f32 %v1119, %v1149
      %v1248 = vadd.f32 %v1120, %v1153
      %v1249 = vadd.f32 %v1121, %v1157
      %v1250 = vadd.f32 %v1122, %v1161
      %v1251 = vadd.f32 %v1123, %v1165
      %v1252 = vadd.f32 %v1124, %v1169
      %v1253 = vadd.f32 %v1125, %v1173
      %v1254 = vadd.f32 %v1126, %v1177
      %v1255 = vadd.f32 %v1127, %v1181
      %v1256 = vadd.f32 %v1128, %v1185
      %v1257 = vadd.f32 %v1129, %v1189
      %v1258 = vadd.f32 %v1130, %v1193
      %v1259 = vsub.f32 %v1195, %v907
      %v1260 = vsub.f32 %v1196, %v908
      %v1261 = vsub.f32 %v1197, %v909
      %v1262 = vsub.f32 %v1198, %v910
      %v1263 = vsub.f32 %v1199, %v911
      %v1264 = vsub.f32 %v1200, %v912
      %v1265 = vsub.f32 %v1201, %v913
      %v1266 = vsub.f32 %v1202, %v914
      %v1267 = vsub.f32 %v1203, %v915
      %v1268 = vsub.f32 %v1204, %v916
      %v1269 = vsub.f32 %v1205, %v917
      %v1270 = vsub.f32 %v1206, %v918
      %v1271 = vsub.f32 %v1207, %v919
      %v1272 = vsub.f32 %v1208, %v920
      %v1273 = vsub.f32 %v1209, %v921
      %v1274 = vsub.f32 %v1210, %v922
      %v1275 = vsub.f32 %v1211, %v923
      %v1276 = vsub.f32 %v1212, %v924
      %v1277 = vsub.f32 %v1213, %v925
      %v1278 = vsub.f32 %v1214, %v926
      %v1279 = vsub.f32 %v1215, %v927
      %v1280 = vsub.f32 %v1216, %v928
      %v1281 = vsub.f32 %v1217, %v929
      %v1282 = vsub.f32 %v1218, %v930
      %v1283 = vsub.f32 %v1219, %v931
      %v1284 = vsub.f32 %v1220, %v932
      %v1285 = vsub.f32 %v1221, %v933
      %v1286 = vsub.f32 %v1222, %v934
      %v1287 = vsub.f32 %v1223, %v935
      %v1288 = vsub.f32 %v1224, %v936
      %v1289 = vsub.f32 %v1225, %v937
      %v1290 = vsub.f32 %v1226, %v938
      %v1291 = vsub.f32 %v1227, %v939
      %v1292 = vsub.f32 %v1228, %v940
      %v1293 = vsub.f32 %v1229, %v941
      %v1294 = vsub.f32 %v1230, %v942
      %v1295 = vsub.f32 %v1231, %v943
      %v1296 = vsub.f32 %v1232, %v944
      %v1297 = vsub.f32 %v1233, %v945
      %v1298 = vsub.f32 %v1234, %v946
      %v1299 = vsub.f32 %v1235, %v947
      %v1300 = vsub.f32 %v1236, %v948
      %v1301 = vsub.f32 %v1237, %v949
      %v1302 = vsub.f32 %v1238, %v950
      %v1303 = vsub.f32 %v1239, %v951
      %v1304 = vsub.f32 %v1240, %v952
      %v1305 = vsub.f32 %v1241, %v953
      %v1306 = vsub.f32 %v1242, %v954
      %v1307 = vsub.f32 %v1243, %v955
      %v1308 = vsub.f32 %v1244, %v956
      %v1309 = vsub.f32 %v1245, %v957
      %v1310 = vsub.f32 %v1246, %v958
      %v1311 = vsub.f32 %v1247, %v959
      %v1312 = vsub.f32 %v1248, %v960
      %v1313 = vsub.f32 %v1249, %v961
      %v1314 = vsub.f32 %v1250, %v962
      %v1315 = vsub.f32 %v1251, %v963
      %v1316 = vsub.f32 %v1252, %v964
      %v1317 = vsub.f32 %v1253, %v965
      %v1318 = vsub.f32 %v1254, %v966
      %v1319 = vsub.f32 %v1255, %v967
      %v1320 = vsub.f32 %v1256, %v968
      %v1321 = vsub.f32 %v1257, %v969
      %v1322 = vsub.f32 %v1258, %v970
      %v1323 = vmax.f32 %v1259, 0.0
      %v1324 = vmax.f32 %v1260, 0.0
      %v1325 = vmax.f32 %v1261, 0.0
      %v1326 = vmax.f32 %v1262, 0.0
      %v1327 = vmax.f32 %v1263, 0.0
      %v1328 = vmax.f32 %v1264, 0.0
      %v1329 = vmax.f32 %v1265, 0.0
      %v1330 = vmax.f32 %v1266, 0.0
      %v1331 = vmax.f32 %v1267, 0.0
      %v1332 = vmax.f32 %v1268, 0.0
      %v1333 = vmax.f32 %v1269, 0.0
      %v1334 = vmax.f32 %v1270, 0.0
      %v1335 = vmax.f32 %v1271, 0.0
      %v1336 = vmax.f32 %v1272, 0.0
      %v1337 = vmax.f32 %v1273, 0.0
      %v1338 = vmax.f32 %v1274, 0.0
      %v1339 = vmax.f32 %v1275, 0.0
      %v1340 = vmax.f32 %v1276, 0.0
      %v1341 = vmax.f32 %v1277, 0.0
      %v1342 = vmax.f32 %v1278, 0.0
      %v1343 = vmax.f32 %v1279, 0.0
      %v1344 = vmax.f32 %v1280, 0.0
      %v1345 = vmax.f32 %v1281, 0.0
      %v1346 = vmax.f32 %v1282, 0.0
      %v1347 = vmax.f32 %v1283, 0.0
      %v1348 = vmax.f32 %v1284, 0.0
      %v1349 = vmax.f32 %v1285, 0.0
      %v1350 = vmax.f32 %v1286, 0.0
      %v1351 = vmax.f32 %v1287, 0.0
      %v1352 = vmax.f32 %v1288, 0.0
      %v1353 = vmax.f32 %v1289, 0.0
      %v1354 = vmax.f32 %v1290, 0.0
      %v1355 = vmax.f32 %v1291, 0.0
      %v1356 = vmax.f32 %v1292, 0.0
      %v1357 = vmax.f32 %v1293, 0.0
      %v1358 = vmax.f32 %v1294, 0.0
      %v1359 = vmax.f32 %v1295, 0.0
      %v1360 = vmax.f32 %v1296, 0.0
      %v1361 = vmax.f32 %v1297, 0.0
      %v1362 = vmax.f32 %v1298, 0.0
      %v1363 = vmax.f32 %v1299, 0.0
      %v1364 = vmax.f32 %v1300, 0.0
      %v1365 = vmax.f32 %v1301, 0.0
      %v1366 = vmax.f32 %v1302, 0.0
      %v1367 = vmax.f32 %v1303, 0.0
      %v1368 = vmax.f32 %v1304, 0.0
      %v1369 = vmax.f32 %v1305, 0.0
      %v1370 = vmax.f32 %v1306, 0.0
      %v1371 = vmax.f32 %v1307, 0.0
      %v1372 = vmax.f32 %v1308, 0.0
      %v1373 = vmax.f32 %v1309, 0.0
      %v1374 = vmax.f32 %v1310, 0.0
      %v1375 = vmax.f32 %v1311, 0.0
      %v1376 = vmax.f32 %v1312, 0.0
      %v1377 = vmax.f32 %v1313, 0.0
      %v1378 = vmax.f32 %v1314, 0.0
      %v1379 = vmax.f32 %v1315, 0.0
      %v1380 = vmax.f32 %v1316, 0.0
      %v1381 = vmax.f32 %v1317, 0.0
      %v1382 = vmax.f32 %v1318, 0.0
      %v1383 = vmax.f32 %v1319, 0.0
      %v1384 = vmax.f32 %v1320, 0.0
      %v1385 = vmax.f32 %v1321, 0.0
      %v1386 = vmax.f32 %v1322, 0.0
      %v1387 = vsub.f32 %v1323, %v212
      %v1388 = vsub.f32 %v1324, %v212
      %v1389 = vsub.f32 %v1325, %v212
      %v1390 = vsub.f32 %v1326, %v212
      %v1391 = vsub.f32 %v1327, %v212
      %v1392 = vsub.f32 %v1328, %v212
      %v1393 = vsub.f32 %v1329, %v212
      %v1394 = vsub.f32 %v1330, %v212
      %v1395 = vsub.f32 %v1331, %v212
      %v1396 = vsub.f32 %v1332, %v212
      %v1397 = vsub.f32 %v1333, %v212
      %v1398 = vsub.f32 %v1334, %v212
      %v1399 = vsub.f32 %v1335, %v212
      %v1400 = vsub.f32 %v1336, %v212
      %v1401 = vsub.f32 %v1337, %v212
      %v1402 = vsub.f32 %v1338, %v212
      %v1403 = vsub.f32 %v1339, %v219
      %v1404 = vsub.f32 %v1340, %v219
      %v1405 = vsub.f32 %v1341, %v219
      %v1406 = vsub.f32 %v1342, %v219
      %v1407 = vsub.f32 %v1343, %v219
      %v1408 = vsub.f32 %v1344, %v219
      %v1409 = vsub.f32 %v1345, %v219
      %v1410 = vsub.f32 %v1346, %v219
      %v1411 = vsub.f32 %v1347, %v219
      %v1412 = vsub.f32 %v1348, %v219
      %v1413 = vsub.f32 %v1349, %v219
      %v1414 = vsub.f32 %v1350, %v219
      %v1415 = vsub.f32 %v1351, %v219
      %v1416 = vsub.f32 %v1352, %v219
      %v1417 = vsub.f32 %v1353, %v219
      %v1418 = vsub.f32 %v1354, %v219
      %v1419 = vsub.f32 %v1355, %v226
      %v1420 = vsub.f32 %v1356, %v226
      %v1421 = vsub.f32 %v1357, %v226
      %v1422 = vsub.f32 %v1358, %v226
      %v1423 = vsub.f32 %v1359, %v226
      %v1424 = vsub.f32 %v1360, %v226
      %v1425 = vsub.f32 %v1361, %v226
      %v1426 = vsub.f32 %v1362, %v226
      %v1427 = vsub.f32 %v1363, %v226
      %v1428 = vsub.f32 %v1364, %v226
      %v1429 = vsub.f32 %v1365, %v226
      %v1430 = vsub.f32 %v1366, %v226
      %v1431 = vsub.f32 %v1367, %v226
      %v1432 = vsub.f32 %v1368, %v226
      %v1433 = vsub.f32 %v1369, %v226
      %v1434 = vsub.f32 %v1370, %v226
      %v1435 = vsub.f32 %v1371, %v233
      %v1436 = vsub.f32 %v1372, %v233
      %v1437 = vsub.f32 %v1373, %v233
      %v1438 = vsub.f32 %v1374, %v233
      %v1439 = vsub.f32 %v1375, %v233
      %v1440 = vsub.f32 %v1376, %v233
      %v1441 = vsub.f32 %v1377, %v233
      %v1442 = vsub.f32 %v1378, %v233
      %v1443 = vsub.f32 %v1379, %v233
      %v1444 = vsub.f32 %v1380, %v233
      %v1445 = vsub.f32 %v1381, %v233
      %v1446 = vsub.f32 %v1382, %v233
      %v1447 = vsub.f32 %v1383, %v233
      %v1448 = vsub.f32 %v1384, %v233
      %v1449 = vsub.f32 %v1385, %v233
      %v1450 = vsub.f32 %v1386, %v233
      %v1451 = vmax.f32 %v1387, 0.0
      %v1452 = vmax.f32 %v1388, 0.0
      %v1453 = vmax.f32 %v1389, 0.0
      %v1454 = vmax.f32 %v1390, 0.0
      %v1455 = vmax.f32 %v1391, 0.0
      %v1456 = vmax.f32 %v1392, 0.0
      %v1457 = vmax.f32 %v1393, 0.0
      %v1458 = vmax.f32 %v1394, 0.0
      %v1459 = vmax.f32 %v1395, 0.0
      %v1460 = vmax.f32 %v1396, 0.0
      %v1461 = vmax.f32 %v1397, 0.0
      %v1462 = vmax.f32 %v1398, 0.0
      %v1463 = vmax.f32 %v1399, 0.0
      %v1464 = vmax.f32 %v1400, 0.0
      %v1465 = vmax.f32 %v1401, 0.0
      %v1466 = vmax.f32 %v1402, 0.0
      %v1467 = vmax.f32 %v1403, 0.0
      %v1468 = vmax.f32 %v1404, 0.0
      %v1469 = vmax.f32 %v1405, 0.0
      %v1470 = vmax.f32 %v1406, 0.0
      %v1471 = vmax.f32 %v1407, 0.0
      %v1472 = vmax.f32 %v1408, 0.0
      %v1473 = vmax.f32 %v1409, 0.0
      %v1474 = vmax.f32 %v1410, 0.0
      %v1475 = vmax.f32 %v1411, 0.0
      %v1476 = vmax.f32 %v1412, 0.0
      %v1477 = vmax.f32 %v1413, 0.0
      %v1478 = vmax.f32 %v1414, 0.0
      %v1479 = vmax.f32 %v1415, 0.0
      %v1480 = vmax.f32 %v1416, 0.0
      %v1481 = vmax.f32 %v1417, 0.0
      %v1482 = vmax.f32 %v1418, 0.0
      %v1483 = vmax.f32 %v1419, 0.0
      %v1484 = vmax.f32 %v1420, 0.0
      %v1485 = vmax.f32 %v1421, 0.0
      %v1486 = vmax.f32 %v1422, 0.0
      %v1487 = vmax.f32 %v1423, 0.0
      %v1488 = vmax.f32 %v1424, 0.0
      %v1489 = vmax.f32 %v1425, 0.0
      %v1490 = vmax.f32 %v1426, 0.0
      %v1491 = vmax.f32 %v1427, 0.0
      %v1492 = vmax.f32 %v1428, 0.0
      %v1493 = vmax.f32 %v1429, 0.0
      %v1494 = vmax.f32 %v1430, 0.0
      %v1495 = vmax.f32 %v1431, 0.0
      %v1496 = vmax.f32 %v1432, 0.0
      %v1497 = vmax.f32 %v1433, 0.0
      %v1498 = vmax.f32 %v1434, 0.0
      %v1499 = vmax.f32 %v1435, 0.0
      %v1500 = vmax.f32 %v1436, 0.0
      %v1501 = vmax.f32 %v1437, 0.0
      %v1502 = vmax.f32 %v1438, 0.0
      %v1503 = vmax.f32 %v1439, 0.0
      %v1504 = vmax.f32 %v1440, 0.0
      %v1505 = vmax.f32 %v1441, 0.0
      %v1506 = vmax.f32 %v1442, 0.0
      %v1507 = vmax.f32 %v1443, 0.0
      %v1508 = vmax.f32 %v1444, 0.0
      %v1509 = vmax.f32 %v1445, 0.0
      %v1510 = vmax.f32 %v1446, 0.0
      %v1511 = vmax.f32 %v1447, 0.0
      %v1512 = vmax.f32 %v1448, 0.0
      %v1513 = vmax.f32 %v1449, 0.0
      %v1514 = vmax.f32 %v1450, 0.0
      %1515 = vst [vmem:[%s199] sm:$0xff] %v1451
      %1516 = vst [vmem:[%s199 + $0x8] sm:$0xff] %v1452
      %1517 = vst [vmem:[%s199 + $0x10] sm:$0xff] %v1453
      %1518 = vst [vmem:[%s199 + $0x18] sm:$0xff] %v1454
      %1519 = vst [vmem:[%s199 + $0x20] sm:$0xff] %v1455
      %1520 = vst [vmem:[%s199 + $0x28] sm:$0xff] %v1456
      %1521 = vst [vmem:[%s199 + $0x30] sm:$0xff] %v1457
      %1522 = vst [vmem:[%s199 + $0x38] sm:$0xff] %v1458
      %1523 = vst [vmem:[%s199 + $0x40] sm:$0xff] %v1459
      %1524 = vst [vmem:[%s199 + $0x48] sm:$0xff] %v1460
      %1525 = vst [vmem:[%s199 + $0x50] sm:$0xff] %v1461
      %1526 = vst [vmem:[%s199 + $0x58] sm:$0xff] %v1462
      %1527 = vst [vmem:[%s199 + $0x60] sm:$0xff] %v1463
      %1528 = vst [vmem:[%s199 + $0x68] sm:$0xff] %v1464
      %1529 = vst [vmem:[%s199 + $0x70] sm:$0xff] %v1465
      %1530 = vst [vmem:[%s199 + $0x78] sm:$0xff] %v1466
      %1531 = vst [vmem:[%s199 + $0x80] sm:$0xff] %v1467
      %1532 = vst [vmem:[%s199 + $0x88] sm:$0xff] %v1468
      %1533 = vst [vmem:[%s199 + $0x90] sm:$0xff] %v1469
      %1534 = vst [vmem:[%s199 + $0x98] sm:$0xff] %v1470
      %1535 = vst [vmem:[%s199 + $0xa0] sm:$0xff] %v1471
      %1536 = vst [vmem:[%s199 + $0xa8] sm:$0xff] %v1472
      %1537 = vst [vmem:[%s199 + $0xb0] sm:$0xff] %v1473
      %1538 = vst [vmem:[%s199 + $0xb8] sm:$0xff] %v1474
      %1539 = vst [vmem:[%s199 + $0xc0] sm:$0xff] %v1475
      %1540 = vst [vmem:[%s199 + $0xc8] sm:$0xff] %v1476
      %1541 = vst [vmem:[%s199 + $0xd0] sm:$0xff] %v1477
      %1542 = vst [vmem:[%s199 + $0xd8] sm:$0xff] %v1478
      %1543 = vst [vmem:[%s199 + $0xe0] sm:$0xff] %v1479
      %1544 = vst [vmem:[%s199 + $0xe8] sm:$0xff] %v1480
      %1545 = vst [vmem:[%s199 + $0xf0] sm:$0xff] %v1481
      %1546 = vst [vmem:[%s199 + $0xf8] sm:$0xff] %v1482
      %1547 = vst [vmem:[%s199 + $0x100] sm:$0xff] %v1483
      %1548 = vst [vmem:[%s199 + $0x108] sm:$0xff] %v1484
      %1549 = vst [vmem:[%s199 + $0x110] sm:$0xff] %v1485
      %1550 = vst [vmem:[%s199 + $0x118] sm:$0xff] %v1486
      %1551 = vst [vmem:[%s199 + $0x120] sm:$0xff] %v1487
      %1552 = vst [vmem:[%s199 + $0x128] sm:$0xff] %v1488
      %1553 = vst [vmem:[%s199 + $0x130] sm:$0xff] %v1489
      %1554 = vst [vmem:[%s199 + $0x138] sm:$0xff] %v1490
      %1555 = vst [vmem:[%s199 + $0x140] sm:$0xff] %v1491
      %1556 = vst [vmem:[%s199 + $0x148] sm:$0xff] %v1492
      %1557 = vst [vmem:[%s199 + $0x150] sm:$0xff] %v1493
      %1558 = vst [vmem:[%s199 + $0x158] sm:$0xff] %v1494
      %1559 = vst [vmem:[%s199 + $0x160] sm:$0xff] %v1495
      %1560 = vst [vmem:[%s199 + $0x168] sm:$0xff] %v1496
      %1561 = vst [vmem:[%s199 + $0x170] sm:$0xff] %v1497
      %1562 = vst [vmem:[%s199 + $0x178] sm:$0xff] %v1498
      %1563 = vst [vmem:[%s199 + $0x180] sm:$0xff] %v1499
      %1564 = vst [vmem:[%s199 + $0x188] sm:$0xff] %v1500
      %1565 = vst [vmem:[%s199 + $0x190] sm:$0xff] %v1501
      %1566 = vst [vmem:[%s199 + $0x198] sm:$0xff] %v1502
      %1567 = vst [vmem:[%s199 + $0x1a0] sm:$0xff] %v1503
      %1568 = vst [vmem:[%s199 + $0x1a8] sm:$0xff] %v1504
      %1569 = vst [vmem:[%s199 + $0x1b0] sm:$0xff] %v1505
      %1570 = vst [vmem:[%s199 + $0x1b8] sm:$0xff] %v1506
      %1571 = vst [vmem:[%s199 + $0x1c0] sm:$0xff] %v1507
      %1572 = vst [vmem:[%s199 + $0x1c8] sm:$0xff] %v1508
      %1573 = vst [vmem:[%s199 + $0x1d0] sm:$0xff] %v1509
      %1574 = vst [vmem:[%s199 + $0x1d8] sm:$0xff] %v1510
      %1575 = vst [vmem:[%s199 + $0x1e0] sm:$0xff] %v1511
      %1576 = vst [vmem:[%s199 + $0x1e8] sm:$0xff] %v1512
      %1577 = vst [vmem:[%s199 + $0x1f0] sm:$0xff] %v1513
      %1578 = vst [vmem:[%s199 + $0x1f8] sm:$0xff] %v1514
      %s1579 = smul.u32 4, %s14
      %p1580 = scmp.lt.s32.totalorder %s1579, 7
      %s1581 = scalar_select %p1580, %s1579, 7
      %s1582 = smul.addr %s1581, 16
      %s1583 = smul.addr %s1582, 8
      %s1584 = scalar_lea.vmem %s3, %s1583
      // Predicated region
      $region33: #{model_forward.1} parent=31 // pred_check
        %p1585 = pneg %p105
      $region34: #{model_forward.1} parent=31 // pred_check_branch
        %1587 = sbr.rel (%p1585) target = $region36
      $region35: #{model_forward.1} parent=31 // pred_region
        %s1588 = smul.u32 4, %s14
      $region36: #{model_forward.1} parent=31 // pred_fallthru
        _
    $region32: #{model_forward.1} parent=5 // pred_fallthru
      _
    %p1589 = scmp.le.s32.totalorder 2, %s9
    // Predicated region
    $region37: #{model_forward.1} parent=5 // pred_check
      %p1590 = pneg %p1589
    $region38: #{model_forward.1} parent=5 // pred_check_branch
      %1592 = sbr.rel (%p1590) target = $region40
    $region39: #{model_forward.1} parent=5 // pred_region
      %s1593 = ssub.s32 %s9, 2
      // Predicated region
      $region41: #{model_forward.1} parent=39 // pred_check
        %p1594 = pneg %p111
      $region42: #{model_forward.1} parent=39 // pred_check_branch
        %1596 = sbr.rel (%p1594) target = $region44
      $region43: #{model_forward.1} parent=39 // pred_region
        %s1597 = smul.u32 4, %s15
        %p1598 = scmp.lt.s32.totalorder %s1597, 7
        %s1599 = scalar_select %p1598, %s1597, 7
        %s1600 = smul.addr %s1599, 16
        %s1601 = smul.addr %s1600, 8
        %s1602 = scalar_lea.vmem %s3, %s1601
      $region44: #{model_forward.1} parent=39 // pred_fallthru
        _
    $region40: #{model_forward.1} parent=5 // pred_fallthru
      _
  $region6: #{model_forward.1} parent=0 // loop_footer
    %s13 = sadd.s32 1, %s9
  $region7: #{model_forward.1} parent=0 // loop_footer_branch
    %8 = sbr.rel target = $region3
  $region8: #{model_forward.1} parent=0 // loop_exit
    _

</llo_original>
